<compile_context>
chip_gen: v7x
topology: tpu7x:2x2x1
jax: 0.10.0
libtpu: 0.0.40
codegen_flags: <defaults>
</compile_context>

<pallas_src>
import functools

import jax
import jax.numpy as jnp
from jax import lax
from jax.experimental import pallas as pl
from jax.experimental.pallas import tpu as pltpu

EPS = 1e-5
LANE = 128
TM_MAX = 512     # max output rows per grid step (im2col path)
TK_MAX = 4608    # single-K-block threshold: covers 9*Cin up to Cin=512


def _round_up(x, m):
    return (x + m - 1) // m * m


def _vmem_limit_bytes():
    try:
        cap = pltpu.get_tpu_info().vmem_capacity_bytes
        return int(cap * 3 // 4)
    except Exception:
        return 32 * 1024 * 1024


# ---------------------------------------------------------------------------
# Kernel 1 (conv1): im2col matmul + BN(scale,shift f32 epilogue) + ReLU.
# grid = (M tiles, K tiles); K is a single block in the common case.
# ---------------------------------------------------------------------------
def _mm_bn_relu_kernel(p_ref, w_ref, scale_ref, shift_ref, o_ref, acc_ref):
    @pl.when(pl.program_id(1) == 0)
    def _():
        acc_ref[...] = jnp.zeros_like(acc_ref)

    acc_ref[...] += jnp.dot(p_ref[...], w_ref[...],
                            preferred_element_type=jnp.float32)

    @pl.when(pl.program_id(1) == pl.num_programs(1) - 1)
    def _():
        y = jnp.maximum(acc_ref[...] * scale_ref[...] + shift_ref[...], 0.0)
        o_ref[...] = y.astype(o_ref.dtype)


# ---------------------------------------------------------------------------
# Kernel 2 (conv2): in-kernel im2col via 9 tap matmuls over a halo'd row slab,
# fused with BN+ReLU and either an identity-residual add or the 1x1 stride-2
# projection (conv3) + BN + ReLU residual.
# ---------------------------------------------------------------------------
def _accumulate_taps(x_ref, w_ref, acc_ref, stride, tr, wo):
    # x_ref: (hs, wp, c_p) bf16 slab (spatial zero halo included, lane-padded C)
    # w_ref: (9, c_p, cout_p) bf16 (tap-major), resident in VMEM
    for t in range(9):
        kh, kw = divmod(t, 3)
        if stride == 1:
            rows, cols = pl.ds(kh, tr), pl.ds(kw, wo)
        else:
            rows = pl.ds(kh, tr, stride=stride)
            cols = pl.ds(kw, wo, stride=stride)
        patch = x_ref[rows, cols, :].reshape(tr * wo, -1)
        contrib = jnp.dot(patch, w_ref[t], preferred_element_type=jnp.float32)
        if t == 0:
            acc_ref[...] = contrib
        else:
            acc_ref[...] += contrib


def _taps_bn_relu_add_kernel(x_ref, w_ref, scale_ref, shift_ref, r_ref,
                             o_ref, acc_ref, *, stride, tr, wo):
    _accumulate_taps(x_ref, w_ref, acc_ref, stride, tr, wo)
    y = jnp.maximum(acc_ref[...] * scale_ref[...] + shift_ref[...], 0.0)
    o_ref[...] = (y + r_ref[...].astype(jnp.float32)).astype(o_ref.dtype)


def _taps_bn_relu_proj_kernel(x_ref, w_ref, scale_ref, shift_ref,
                              x3_ref, w3_ref, scale3_ref, shift3_ref,
                              o_ref, acc_ref, *, stride, tr, wo):
    _accumulate_taps(x_ref, w_ref, acc_ref, stride, tr, wo)
    y = jnp.maximum(acc_ref[...] * scale_ref[...] + shift_ref[...], 0.0)
    # Fused 1x1 stride-2 projection (conv3) + BN + ReLU on the strided input.
    r = jnp.dot(x3_ref[...], w3_ref[...], preferred_element_type=jnp.float32)
    r = jnp.maximum(r * scale3_ref[...] + shift3_ref[...], 0.0)
    o_ref[...] = (y + r).astype(o_ref.dtype)


# ---------------------------------------------------------------------------
# Wrapper-side glue
# ---------------------------------------------------------------------------
def _bn_fold(params, cout_p):
    """Eval-mode BN + conv bias -> f32 (scale, shift), lane-padded to cout_p."""
    _, b, gamma, beta, mean, var = params
    cout = b.shape[0]
    scale = gamma / jnp.sqrt(var + EPS)
    shift = beta + (b - mean) * scale
    scale = jnp.pad(scale, (0, cout_p - cout)).reshape(1, cout_p).astype(jnp.float32)
    shift = jnp.pad(shift, (0, cout_p - cout)).reshape(1, cout_p).astype(jnp.float32)
    return scale, shift


def _im2col(x_nhwc, ksize, stride):
    """bf16 patch matrix (N*Ho*Wo, k*k*Cin) for wrapper-side im2col (conv1)."""
    x = x_nhwc.astype(jnp.bfloat16)
    pad = (ksize - 1) // 2
    if pad:
        x = jnp.pad(x, ((0, 0), (pad, pad), (pad, pad), (0, 0)))
    n, hp, wp, c = x.shape
    ho = (hp - ksize) // stride + 1
    wo = (wp - ksize) // stride + 1
    taps = []
    for kh in range(ksize):
        for kw in range(ksize):
            taps.append(x[:, kh:kh + stride * (ho - 1) + 1:stride,
                             kw:kw + stride * (wo - 1) + 1:stride, :])
    patches = jnp.concatenate(taps, axis=-1).reshape(n * ho * wo, ksize * ksize * c)
    return patches, ho, wo


def conv_bn_relu_im2col(x_nhwc, params, ksize, stride, *, out_dtype):
    """Conv+BN+ReLU via wrapper-side im2col (used for conv1, whose input channel
    count is small / not lane-aligned).  Returns (flat (M, Cout_p), Ho, Wo)."""
    w = params[0]
    cout = w.shape[0]
    cout_p = _round_up(cout, LANE)

    pm, ho, wo = _im2col(x_nhwc, ksize, stride)
    m, kdim = pm.shape

    w2d = jnp.transpose(w, (2, 3, 1, 0)).reshape(kdim, cout)
    w2d = jnp.pad(w2d, ((0, 0), (0, cout_p - cout))).astype(jnp.bfloat16)
    scale, shift = _bn_fold(params, cout_p)

    # M tiling: big tiles, but >= 2 grid steps so both v7x TensorCores get work.
    n_m = max(1, pl.cdiv(m, TM_MAX))
    if m >= 16 and n_m < 2:
        n_m = 2
    tm = _round_up(pl.cdiv(m, n_m), 8)
    m_pad = _round_up(m, tm)
    if m_pad != m:
        pm = jnp.pad(pm, ((0, m_pad - m), (0, 0)))

    # K: single full block unless the contraction is very large; the tiled case
    # uses a 128-aligned tile that never overshoots kdim by more than one tile.
    if kdim > TK_MAX:
        tk = _round_up(pl.cdiv(kdim, pl.cdiv(kdim, TK_MAX)), LANE)
        k_pad = _round_up(kdim, tk)
        pm = jnp.pad(pm, ((0, 0), (0, k_pad - kdim)))
        w2d = jnp.pad(w2d, ((0, k_pad - kdim), (0, 0)))
    else:
        tk, k_pad = kdim, kdim

    grid = (m_pad // tm, k_pad // tk)
    out = pl.pallas_call(
        _mm_bn_relu_kernel,
        out_shape=jax.ShapeDtypeStruct((m_pad, cout_p), out_dtype),
        grid_spec=pltpu.PrefetchScalarGridSpec(
            num_scalar_prefetch=0, grid=grid,
            in_specs=[pl.BlockSpec((tm, tk), lambda i, k: (i, k)),
                      pl.BlockSpec((tk, cout_p), lambda i, k: (k, 0)),
                      pl.BlockSpec((1, cout_p), lambda i, k: (0, 0)),
                      pl.BlockSpec((1, cout_p), lambda i, k: (0, 0))],
            out_specs=pl.BlockSpec((tm, cout_p), lambda i, k: (i, 0)),
            scratch_shapes=[pltpu.VMEM((tm, cout_p), jnp.float32)]),
        compiler_params=pltpu.CompilerParams(
            dimension_semantics=("parallel", "arbitrary"),
            vmem_limit_bytes=_vmem_limit_bytes()),
    )(pm, w2d, scale, shift)
    return out[:m], ho, wo


def _choose_tr(ho, wo, n):
    """Output rows per grid step: multiple of 8 (sublane-aligned M), ~512-row
    matmuls, and at least 2 grid steps overall when possible (v7x dual TC)."""
    tr = max(8, (512 // max(wo, 1)) // 8 * 8)
    tr = min(tr, _round_up(ho, 8))
    if n * pl.cdiv(ho, tr) < 2 and ho > 8:
        tr = _round_up(pl.cdiv(ho, 2), 8)
    return tr


def conv3x3_bn_relu_fused(x, params, stride, *, residual=None, proj=None,
                          out_dtype=jnp.float32):
    """3x3 conv + BN + ReLU with in-kernel im2col, fused with either an identity
    residual add or a 1x1 stride-2 projection (conv3+BN+ReLU) residual.

    x: (N, H, W, C_p) bf16 activation whose channel dim is lane-padded (%128==0).
    Returns (N, Ho, Wo, Cout_p) with lane-padded output channels."""
    w = params[0]
    cout, cin = w.shape[0], w.shape[1]
    n, h, w_sp, c_p = x.shape
    cout_p = _round_up(cout, LANE)
    ho = (h - 1) // stride + 1
    wo = (w_sp - 1) // stride + 1

    tr = _choose_tr(ho, wo, n)
    ho_pad = _round_up(ho, tr)
    n_rt = ho_pad // tr
    trw = tr * wo
    m_out = n * ho_pad * wo

    # Tap-major folded weights (9, C_p, Cout_p) bf16, resident in VMEM.
    w9 = jnp.transpose(w, (2, 3, 1, 0)).reshape(9, cin, cout)
    w9 = jnp.pad(w9, ((0, 0), (0, c_p - cin), (0, cout_p - cout))).astype(jnp.bfloat16)
    scale, shift = _bn_fold(params, cout_p)

    # Spatial zero halo (pad=1) + extra zero rows at the bottom for ho_pad > ho.
    hs = (tr - 1) * stride + 3                 # slab height (with halo)
    hp = (ho_pad - 1) * stride + 3             # total padded rows needed
    x_pad = jnp.pad(x, ((0, 0), (1, hp - h - 1), (1, 1), (0, 0)))
    wp = w_sp + 2

    # Overlapping row slabs (halo duplicated wrapper-side): (N*n_rt, hs, wp, C_p).
    if n_rt == 1:
        slabs = x_pad
    else:
        row_idx = (jnp.arange(n_rt) * (tr * stride))[:, None] + jnp.arange(hs)[None, :]
        slabs = x_pad[:, row_idx].reshape(n * n_rt, hs, wp, c_p)

    grid = (n * n_rt,)
    x_spec = pl.BlockSpec((None, hs, wp, c_p), lambda j: (j, 0, 0, 0))
    w_spec = pl.BlockSpec((9, c_p, cout_p), lambda j: (0, 0, 0))
    v_spec = pl.BlockSpec((1, cout_p), lambda j: (0, 0))
    o_spec = pl.BlockSpec((trw, cout_p), lambda j: (j, 0))
    out_shape = jax.ShapeDtypeStruct((m_out, cout_p), out_dtype)
    scratch = [pltpu.VMEM((trw, cout_p), jnp.float32)]
    cparams = pltpu.CompilerParams(dimension_semantics=("parallel",),
                                   vmem_limit_bytes=_vmem_limit_bytes())

    if residual is not None:
        r = jnp.pad(residual, ((0, 0), (0, ho_pad - ho), (0, 0),
                               (0, cout_p - residual.shape[-1])))
        r = r.reshape(m_out, cout_p).astype(jnp.bfloat16)
        kern = functools.partial(_taps_bn_relu_add_kernel,
                                 stride=stride, tr=tr, wo=wo)
        out = pl.pallas_call(
            kern, out_shape=out_shape,
            grid_spec=pltpu.PrefetchScalarGridSpec(
                num_scalar_prefetch=0, grid=grid,
                in_specs=[x_spec, w_spec, v_spec, v_spec,
                          pl.BlockSpec((trw, cout_p), lambda j: (j, 0))],
                out_specs=o_spec, scratch_shapes=scratch),
            compiler_params=cparams,
        )(slabs, w9, scale, shift, r)
    else:
        proj_x, proj_params = proj
        w3 = proj_params[0]
        cin3 = w3.shape[1]
        cin3_p = _round_up(cin3, LANE)         # lane-pad the 1x1 projection input
        x3 = jnp.pad(proj_x, ((0, 0), (0, ho_pad - ho), (0, 0),
                              (0, cin3_p - proj_x.shape[-1])))
        x3 = x3.reshape(m_out, cin3_p).astype(jnp.bfloat16)
        w3m = jnp.transpose(w3, (2, 3, 1, 0)).reshape(cin3, cout)
        w3m = jnp.pad(w3m, ((0, cin3_p - cin3), (0, cout_p - cout))).astype(jnp.bfloat16)
        scale3, shift3 = _bn_fold(proj_params, cout_p)
        kern = functools.partial(_taps_bn_relu_proj_kernel,
                                 stride=stride, tr=tr, wo=wo)
        out = pl.pallas_call(
            kern, out_shape=out_shape,
            grid_spec=pltpu.PrefetchScalarGridSpec(
                num_scalar_prefetch=0, grid=grid,
                in_specs=[x_spec, w_spec, v_spec, v_spec,
                          pl.BlockSpec((trw, cin3_p), lambda j: (j, 0)),
                          pl.BlockSpec((cin3_p, cout_p), lambda j: (0, 0)),
                          v_spec, v_spec],
                out_specs=o_spec, scratch_shapes=scratch),
            compiler_params=cparams,
        )(slabs, w9, scale, shift, x3, w3m, scale3, shift3)

    return out.reshape(n, ho_pad, wo, cout_p)[:, :ho]


# ---------------------------------------------------------------------------
# ResConv2d forward (accepts/returns PyTorch NCHW)
# ---------------------------------------------------------------------------
def resconv2d_forward(x_nchw, params, stride):
    x = jnp.transpose(x_nchw, (0, 2, 3, 1))            # NCHW -> NHWC
    n = x.shape[0]
    cout = params["conv1"][0].shape[0]
    cout_p = _round_up(cout, LANE)

    # conv1: 3x3 stride 1 (wrapper-side im2col; input channels small / unaligned).
    out1, ho1, wo1 = conv_bn_relu_im2col(x, params["conv1"], 3, 1,
                                         out_dtype=jnp.bfloat16)
    out1 = out1.reshape(n, ho1, wo1, cout_p)            # bf16, lane-padded channels

    if stride == 1:
        # PyTorch `out += input` requires nIn == nOut.
        if x.shape[-1] != cout:
            raise ValueError("ResConv2d(stride=1) requires nIn == nOut")
        out = conv3x3_bn_relu_fused(out1, params["conv2"], 1, residual=x)
    else:
        proj_x = x[:, ::stride, ::stride, :]
        out = conv3x3_bn_relu_fused(out1, params["conv2"], stride,
                                    proj=(proj_x, params["conv3"]))

    return jnp.transpose(out[..., :cout], (0, 3, 1, 2))  # NHWC -> NCHW


# ---------------------------------------------------------------------------
# Pure-JAX reference (for correctness check)
# ---------------------------------------------------------------------------
def _ref_cbr(x_nhwc, params, ksize, stride):
    w, b, gamma, beta, mean, var = params
    pad = (ksize - 1) // 2
    y = lax.conv_general_dilated(
        x_nhwc, jnp.transpose(w, (2, 3, 1, 0)),
        window_strides=(stride, stride),
        padding=((pad, pad), (pad, pad)),
        dimension_numbers=("NHWC", "HWIO", "NHWC"))
    y = y + b
    y = (y - mean) / jnp.sqrt(var + EPS) * gamma + beta
    return jnp.maximum(y, 0.0)


def _ref_resconv2d(x_nchw, params, stride):
    x = jnp.transpose(x_nchw, (0, 2, 3, 1))
    out1 = _ref_cbr(x, params["conv1"], 3, 1)
    if stride == 1:
        out = _ref_cbr(out1, params["conv2"], 3, 1) + x
    else:
        out = _ref_cbr(out1, params["conv2"], 3, 2) + _ref_cbr(x, params["conv3"], 1, 2)
    return jnp.transpose(out, (0, 3, 1, 2))


# ---------------------------------------------------------------------------
# Deterministic parameter construction
# ---------------------------------------------------------------------------
def _make_cbr_params(key, nin, nout, ksize):
    ks = jax.random.split(key, 6)
    w = 0.1 * jax.random.normal(ks[0], (nout, nin, ksize, ksize), jnp.float32)
    b = 0.1 * jax.random.normal(ks[1], (nout,), jnp.float32)
    gamma = 1.0 + 0.1 * jax.random.normal(ks[2], (nout,), jnp.float32)
    beta = 0.1 * jax.random.normal(ks[3], (nout,), jnp.float32)
    mean = 0.1 * jax.random.normal(ks[4], (nout,), jnp.float32)
    var = 0.5 + 0.5 * jnp.abs(jax.random.normal(ks[5], (nout,), jnp.float32))
    return (w, b, gamma, beta, mean, var)


def make_resconv2d_params(key, nin, nout, stride):
    k1, k2, k3 = jax.random.split(key, 3)
    params = {
        "conv1": _make_cbr_params(k1, nin, nout, 3),
        "conv2": _make_cbr_params(k2, nout, nout, 3),
    }
    if stride != 1:
        params["conv3"] = _make_cbr_params(k3, nin, nout, 1)
    return params


if __name__ == "__main__":
    root = jax.random.PRNGKey(0)
    kx1, kx2, kp1, kp2 = jax.random.split(root, 4)

    # Case A: stride=1 (identity residual requires nIn == nOut).
    x1 = jax.random.normal(kx1, (2, 8, 16, 16), jnp.float32)       # NCHW
    p1 = make_resconv2d_params(kp1, nin=8, nout=8, stride=1)
    out1 = jax.block_until_ready(resconv2d_forward(x1, p1, stride=1))
    ref1 = _ref_resconv2d(x1, p1, stride=1)
    assert out1.shape == (2, 8, 16, 16)
    # bf16 operands (f32 accumulation) -> relaxed tolerances vs. pure-f32 ref.
    assert jnp.allclose(out1, ref1, rtol=5e-2, atol=5e-2)

    # Case B: stride=2 (projection residual via fused 1x1 stride-2 conv).
    x2 = jax.random.normal(kx2, (2, 4, 16, 16), jnp.float32)       # NCHW
    p2 = make_resconv2d_params(kp2, nin=4, nout=8, stride=2)
    out2 = jax.block_until_ready(resconv2d_forward(x2, p2, stride=2))
    ref2 = _ref_resconv2d(x2, p2, stride=2)
    assert out2.shape == (2, 8, 8, 8)
    assert jnp.allclose(out2, ref2, rtol=5e-2, atol=5e-2)

    print("KERNEL_OK")
</pallas_src>

<mosaic_0001>
module attributes {stable_mosaic.version = 11 : i64} {
  func.func @_mm_bn_relu_kernel(%arg0: i32, %arg1: i32, %arg2: memref<256x72xbf16, #tpu.memory_space<vmem>>, %arg3: memref<72x128xbf16, #tpu.memory_space<vmem>>, %arg4: memref<1x128xf32, #tpu.memory_space<vmem>>, %arg5: memref<1x128xf32, #tpu.memory_space<vmem>>, %arg6: memref<256x128xbf16, #tpu.memory_space<vmem>>, %arg7: memref<256x128xf32, #tpu.memory_space<vmem>>) attributes {dimension_semantics = [#tpu.dimension_semantics<parallel>, #tpu.dimension_semantics<arbitrary>], iteration_bounds = array<i64: 2, 1>, scalar_prefetch = 0 : i64, scratch_operands = 1 : i64, tpu.core_type = #tpu.core_type<tc>, window_params = [{transform_indices = @transform_0, window_bounds = array<i64: 256, 72>}, {transform_indices = @transform_1, window_bounds = array<i64: 72, 128>}, {pipeline_mode = #tpu.pipeline_mode<synchronous>, transform_indices = @transform_2, window_bounds = array<i64: 1, 128>}, {pipeline_mode = #tpu.pipeline_mode<synchronous>, transform_indices = @transform_3, window_bounds = array<i64: 1, 128>}, {transform_indices = @transform_4, window_bounds = array<i64: 256, 128>}]} {
    %c0_i32 = arith.constant 0 : i32
    %0 = arith.cmpi eq, %arg1, %c0_i32 : i32
    %1 = arith.extui %0 : i1 to i32
    %c0_i32_0 = arith.constant 0 : i32
    %2 = arith.cmpi ne, %1, %c0_i32_0 : i32
    scf.if %2 {
      %cst_10 = arith.constant 0.000000e+00 : f32
      %12 = vector.broadcast %cst_10 : f32 to vector<256x128xf32>
      %c0_11 = arith.constant 0 : index
      %c0_12 = arith.constant 0 : index
      %13 = vector.load %arg7[%c0_11, %c0_12] : memref<256x128xf32, #tpu.memory_space<vmem>>, vector<256x128xf32>
      tpu.vector_store %arg7[%c0_11, %c0_12], %12 {strides = array<i32>} : memref<256x128xf32, #tpu.memory_space<vmem>>, vector<256x128xf32>,
    } else {
    }
    %c0 = arith.constant 0 : index
    %c0_1 = arith.constant 0 : index
    %3 = vector.load %arg7[%c0, %c0_1] : memref<256x128xf32, #tpu.memory_space<vmem>>, vector<256x128xf32>
    %c0_2 = arith.constant 0 : index
    %c0_3 = arith.constant 0 : index
    %4 = vector.load %arg2[%c0_2, %c0_3] : memref<256x72xbf16, #tpu.memory_space<vmem>>, vector<256x72xbf16>
    %c0_4 = arith.constant 0 : index
    %c0_5 = arith.constant 0 : index
    %5 = vector.load %arg3[%c0_4, %c0_5] : memref<72x128xbf16, #tpu.memory_space<vmem>>, vector<72x128xbf16>
    %cst = arith.constant dense<0.000000e+00> : vector<256x128xf32>
    %6 = tpu.matmul %4, %5, %cst {dimension_numbers = #tpu.dot_dimension_numbers<[1], [0], [0], [1], [0, 0, 1, 1], [], []>} : vector<256x72xbf16>, vector<72x128xbf16>, vector<256x128xf32> -> vector<256x128xf32>
    %7 = arith.addf %3, %6 : vector<256x128xf32>
    %c0_6 = arith.constant 0 : index
    %c0_7 = arith.constant 0 : index
    %8 = vector.load %arg7[%c0_6, %c0_7] : memref<256x128xf32, #tpu.memory_space<vmem>>, vector<256x128xf32>
    tpu.vector_store %arg7[%c0_6, %c0_7], %7 {strides = array<i32>} : memref<256x128xf32, #tpu.memory_space<vmem>>, vector<256x128xf32>,
    %c0_i32_8 = arith.constant 0 : i32
    %9 = arith.cmpi eq, %arg1, %c0_i32_8 : i32
    %10 = arith.extui %9 : i1 to i32
    %c0_i32_9 = arith.constant 0 : i32
    %11 = arith.cmpi ne, %10, %c0_i32_9 : i32
    scf.if %11 {
      %c0_10 = arith.constant 0 : index
      %c0_11 = arith.constant 0 : index
      %12 = vector.load %arg7[%c0_10, %c0_11] : memref<256x128xf32, #tpu.memory_space<vmem>>, vector<256x128xf32>
      %c0_12 = arith.constant 0 : index
      %c0_13 = arith.constant 0 : index
      %13 = vector.load %arg4[%c0_12, %c0_13] : memref<1x128xf32, #tpu.memory_space<vmem>>, vector<1x128xf32>
      %14 = vector.broadcast %13 : vector<1x128xf32> to vector<256x128xf32>
      %15 = arith.mulf %12, %14 : vector<256x128xf32>
      %c0_14 = arith.constant 0 : index
      %c0_15 = arith.constant 0 : index
      %16 = vector.load %arg5[%c0_14, %c0_15] : memref<1x128xf32, #tpu.memory_space<vmem>>, vector<1x128xf32>
      %17 = vector.broadcast %16 : vector<1x128xf32> to vector<256x128xf32>
      %18 = arith.addf %15, %17 : vector<256x128xf32>
      %cst_16 = arith.constant 0.000000e+00 : f32
      %19 = vector.broadcast %cst_16 : f32 to vector<256x128xf32>
      %20 = arith.maximumf %18, %19 : vector<256x128xf32>
      %21 = arith.truncf %20 : vector<256x128xf32> to vector<256x128xbf16>
      %c0_17 = arith.constant 0 : index
      %c0_18 = arith.constant 0 : index
      %22 = vector.load %arg6[%c0_17, %c0_18] : memref<256x128xbf16, #tpu.memory_space<vmem>>, vector<256x128xbf16>
      tpu.vector_store %arg6[%c0_17, %c0_18], %21 {strides = array<i32>} : memref<256x128xbf16, #tpu.memory_space<vmem>>, vector<256x128xbf16>,
    } else {
    }
    return
  }
  func.func @transform_0(%arg0: i32, %arg1: i32) -> (i32, i32) {
    %c0_i32 = arith.constant 0 : i32
    return %arg0, %arg1 : i32, i32
  }
  func.func @transform_1(%arg0: i32, %arg1: i32) -> (i32, i32) {
    %c0_i32 = arith.constant 0 : i32
    %c0_i32_0 = arith.constant 0 : i32
    return %arg1, %c0_i32 : i32, i32
  }
  func.func @transform_2(%arg0: i32, %arg1: i32) -> (i32, i32) {
    %c0_i32 = arith.constant 0 : i32
    %c0_i32_0 = arith.constant 0 : i32
    %c0_i32_1 = arith.constant 0 : i32
    return %c0_i32, %c0_i32_0 : i32, i32
  }
  func.func @transform_3(%arg0: i32, %arg1: i32) -> (i32, i32) {
    %c0_i32 = arith.constant 0 : i32
    %c0_i32_0 = arith.constant 0 : i32
    %c0_i32_1 = arith.constant 0 : i32
    return %c0_i32, %c0_i32_0 : i32, i32
  }
  func.func @transform_4(%arg0: i32, %arg1: i32) -> (i32, i32) {
    %c0_i32 = arith.constant 0 : i32
    %c0_i32_0 = arith.constant 0 : i32
    return %arg0, %c0_i32 : i32, i32
  }
}

</mosaic_0001>

<llo_original>
// kernel: tpu_custom_call.1
$region0: #{tpu_custom_call.1}
  #allocation0 [shape = 'u32[]', space=smem, size = 0x4, offset = 0x4, fixed_abs, tag = 'smem constant byte address 0x4 - core index']
  #allocation1 [shape = 'u32[144,128]{1,0:T(1,128)}', space=vmem, size = 0x12000, scoped, tag = 'internal scratch']
  #allocation2 [shape = 'f32[256,128]{1,0:T(8,128)}', space=vmem, size = 0x20000, scoped, tag = 'scratch operand']
  %s0 = inlined_call_operand.vmem [shape: bf16[512,72], index: 0, kind: input, shape index: {}]
  %s1 = inlined_call_operand.vmem [shape: bf16[72,128], index: 1, kind: input, shape index: {}]
  %s2 = inlined_call_operand.vmem [shape: f32[1,128], index: 2, kind: input, shape index: {}]
  %s3 = inlined_call_operand.vmem [shape: f32[1,128], index: 3, kind: input, shape index: {}]
  %s4 = inlined_call_operand.hbm [shape: bf16[512,128], index: 4, kind: output, shape index: {}]
  %s5 = sld [smem:[#allocation0]]
  $region57: #{tpu_custom_call.1} parent=0
    _
  %s7 = ssub.s32 1, %s5
  %s8 = scalar_select 0, %s7, %s5
  $region1: #{tpu_custom_call.1} parent=0
    #allocation3 [shape = 'u8[131072]{0}', space=vmem, size = 0x20000, scoped, tag = 'output window, operand 0']
    #allocation4 [shape = 's32[2]{0}', space=sflag, size = 0x8, scoped, tag = 'scoped memory for tpu_custom_call.1']
    %9 = vsyncpa [#allocation4], 0
    %s10 = scalar_lea.sflag [#allocation4], 1
    %11 = vsyncpa %s10, 0
    loop: start=0, step=1, limit=4
    $region2: #{tpu_custom_call.1} parent=1 // loop_pre_header
      _
    $region3: #{tpu_custom_call.1} parent=1 // loop_header
      %s13 = sphi 0, %s17
      %p14 = scmp.ge.s32.totalorder %s13, 4
      %s20 = sphi 0, %s32
      %s21 = sphi 0, %s28
      %s22 = sphi 0, %s20
      %s23 = sphi 0, %s21
      %s24 = sphi 0, %s22
      %s25 = sphi 0, %s23
      %s37 = sphi 0, %s39
      %s40 = sphi 0, %s37
      %s41 = sphi 0, %s40
      %s57 = sphi 0, %s41
      %s63 = sphi 0, %s65
      %s66 = sphi 0, %s63
      %s67 = sphi 0, %s66
      %s83 = sphi 0, %s67
      %s87 = sphi 0, %s87
      %s89 = sphi 0, %s87
      %s90 = sphi 0, %s89
      %s104 = sphi 0, %s90
      %s108 = sphi 0, %s108
      %s110 = sphi 0, %s108
      %s111 = sphi 0, %s110
      %s125 = sphi 0, %s111
      %s131 = sphi 0, %s133
      %s134 = sphi 0, %s131
      %s135 = sphi 0, %s134
      %s151 = sphi 0, %s135
    $region4: #{tpu_custom_call.1} parent=1 // loop_header_branch
      %16 = sbr.rel (%p14) target = $region8
    $region5: #{tpu_custom_call.1} parent=1 // loop_body
      %s18 = ssub.s32 %s13, 1
      %s19 = ssub.s32 %s13, 2
      %s26 = sadd.s32 1, %s21
      %p27 = scmp.ge.s32.totalorder %s26, 1
      %s28 = scalar_select %p27, 0, %s26
      %s29 = sadd.s32 1, %s20
      %s30 = scalar_select %p27, %s29, %s20
      %p31 = scmp.ge.s32.totalorder %s30, 2
      %s32 = scalar_select %p31, 0, %s30
      %s33 = ssub.s32 %s20, %s32
      %s34 = ssub.s32 %s21, %s28
      %s35 = sor.u32 %s33, %s34
      %p36 = scmp.eq.s32.totalorder %s35, 0
      %s38 = sadd.s32 %s37, 1
      %s39 = scalar_select %p36, %s37, %s38
      %p42 = pneg %p36
      %p43 = scmp.eq.s32.totalorder %s13, 1
      %p44 = por %p42, %p43
      %p45 = scmp.ne.s32.totalorder %s37, %s40
      %p46 = scmp.eq.s32.totalorder %s13, 0
      %p47 = por %p45, %p46
      %p48 = scmp.ne.s32.totalorder %s37, %s40
      %p49 = scmp.eq.s32.totalorder %s18, 1
      %p50 = por %p48, %p49
      %p51 = scmp.ne.s32.totalorder %s40, %s41
      %p52 = scmp.eq.s32.totalorder %s18, 0
      %p53 = por %p51, %p52
      %p54 = scmp.ne.s32.totalorder %s40, %s41
      %p55 = scmp.eq.s32.totalorder %s19, 1
      %p56 = por %p54, %p55
      %p58 = scmp.ne.s32.totalorder %s41, %s57
      %p59 = scmp.eq.s32.totalorder %s19, 0
      %p60 = por %p58, %p59
      %s61 = ssub.s32 %s21, %s28
      %p62 = scmp.eq.s32.totalorder %s61, 0
      %s64 = sadd.s32 %s63, 1
      %s65 = scalar_select %p62, %s63, %s64
      %p68 = pneg %p62
      %p69 = scmp.eq.s32.totalorder %s13, 1
      %p70 = por %p68, %p69
      %p71 = scmp.ne.s32.totalorder %s63, %s66
      %p72 = scmp.eq.s32.totalorder %s13, 0
      %p73 = por %p71, %p72
      %p74 = scmp.ne.s32.totalorder %s63, %s66
      %p75 = scmp.eq.s32.totalorder %s18, 1
      %p76 = por %p74, %p75
      %p77 = scmp.ne.s32.totalorder %s66, %s67
      %p78 = scmp.eq.s32.totalorder %s18, 0
      %p79 = por %p77, %p78
      %p80 = scmp.ne.s32.totalorder %s66, %s67
      %p81 = scmp.eq.s32.totalorder %s19, 1
      %p82 = por %p80, %p81
      %p84 = scmp.ne.s32.totalorder %s67, %s83
      %p85 = scmp.eq.s32.totalorder %s19, 0
      %p86 = por %p84, %p85
      %s88 = sadd.s32 %s87, 1
      %p91 = scmp.eq.s32.totalorder %s13, 1
      %p92 = scmp.ne.s32.totalorder %s87, %s89
      %p93 = scmp.eq.s32.totalorder %s13, 0
      %p94 = por %p92, %p93
      %p95 = scmp.ne.s32.totalorder %s87, %s89
      %p96 = scmp.eq.s32.totalorder %s18, 1
      %p97 = por %p95, %p96
      %p98 = scmp.ne.s32.totalorder %s89, %s90
      %p99 = scmp.eq.s32.totalorder %s18, 0
      %p100 = por %p98, %p99
      %p101 = scmp.ne.s32.totalorder %s89, %s90
      %p102 = scmp.eq.s32.totalorder %s19, 1
      %p103 = por %p101, %p102
      %p105 = scmp.ne.s32.totalorder %s90, %s104
      %p106 = scmp.eq.s32.totalorder %s19, 0
      %p107 = por %p105, %p106
      %s109 = sadd.s32 %s108, 1
      %p112 = scmp.eq.s32.totalorder %s13, 1
      %p113 = scmp.ne.s32.totalorder %s108, %s110
      %p114 = scmp.eq.s32.totalorder %s13, 0
      %p115 = por %p113, %p114
      %p116 = scmp.ne.s32.totalorder %s108, %s110
      %p117 = scmp.eq.s32.totalorder %s18, 1
      %p118 = por %p116, %p117
      %p119 = scmp.ne.s32.totalorder %s110, %s111
      %p120 = scmp.eq.s32.totalorder %s18, 0
      %p121 = por %p119, %p120
      %p122 = scmp.ne.s32.totalorder %s110, %s111
      %p123 = scmp.eq.s32.totalorder %s19, 1
      %p124 = por %p122, %p123
      %p126 = scmp.ne.s32.totalorder %s111, %s125
      %p127 = scmp.eq.s32.totalorder %s19, 0
      %p128 = por %p126, %p127
      %s129 = ssub.s32 %s20, %s32
      %p130 = scmp.eq.s32.totalorder %s129, 0
      %s132 = sadd.s32 %s131, 1
      %s133 = scalar_select %p130, %s131, %s132
      %p136 = pneg %p130
      %p137 = scmp.eq.s32.totalorder %s13, 1
      %p138 = por %p136, %p137
      %p139 = scmp.ne.s32.totalorder %s131, %s134
      %p140 = scmp.eq.s32.totalorder %s13, 0
      %p141 = por %p139, %p140
      %p142 = scmp.ne.s32.totalorder %s131, %s134
      %p143 = scmp.eq.s32.totalorder %s18, 1
      %p144 = por %p142, %p143
      %p145 = scmp.ne.s32.totalorder %s134, %s135
      %p146 = scmp.eq.s32.totalorder %s18, 0
      %p147 = por %p145, %p146
      %p148 = scmp.ne.s32.totalorder %s134, %s135
      %p149 = scmp.eq.s32.totalorder %s19, 1
      %p150 = por %p148, %p149
      %p152 = scmp.ne.s32.totalorder %s135, %s151
      %p153 = scmp.eq.s32.totalorder %s19, 0
      %p154 = por %p152, %p153
      %p155 = scmp.le.s32.totalorder 1, %s13
      %p156 = scmp.lt.s32.totalorder %s13, 3
      %p157 = pnand %p155, %p156
      %p158 = pneg %p157
      // Predicated region
      $region9: #{tpu_custom_call.1} parent=5 // pred_check
        _
      $region10: #{tpu_custom_call.1} parent=5 // pred_check_branch
        %160 = sbr.rel (%p157) target = $region12
      $region11: #{tpu_custom_call.1} parent=5 // pred_region
        %s161 = ssub.s32 %s13, 1
        // Predicated region
        $region13: #{tpu_custom_call.1} parent=11 // pred_check
          %p162 = pneg %p79
        $region14: #{tpu_custom_call.1} parent=11 // pred_check_branch
          %164 = sbr.rel (%p162) target = $region16
        $region15: #{tpu_custom_call.1} parent=11 // pred_region
          %s165 = smul.u32 9, %s23
          %p166 = scmp.lt.s32.totalorder %s165, 8
          %s167 = scalar_select %p166, %s165, 8
          %s168 = smul.addr %s167, 4
          %s169 = scalar_lea.vmem %s1, %s168
          %s170 = smul.u32 9, %s23
        $region16: #{tpu_custom_call.1} parent=11 // pred_fallthru
          _
        // Predicated region
        $region17: #{tpu_custom_call.1} parent=11 // pred_check
          %p171 = pneg %p100
        $region18: #{tpu_custom_call.1} parent=11 // pred_check_branch
          %173 = sbr.rel (%p171) target = $region20
        $region19: #{tpu_custom_call.1} parent=11 // pred_region
          _
        $region20: #{tpu_custom_call.1} parent=11 // pred_fallthru
          _
        // Predicated region
        $region21: #{tpu_custom_call.1} parent=11 // pred_check
          %p174 = pneg %p121
        $region22: #{tpu_custom_call.1} parent=11 // pred_check_branch
          %176 = sbr.rel (%p174) target = $region24
        $region23: #{tpu_custom_call.1} parent=11 // pred_region
          _
        $region24: #{tpu_custom_call.1} parent=11 // pred_fallthru
          _
      $region12: #{tpu_custom_call.1} parent=5 // pred_fallthru
        _
      %p177 = scmp.lt.s32.totalorder %s13, 2
      // Predicated region
      $region25: #{tpu_custom_call.1} parent=5 // pred_check
        %p178 = pneg %p177
      $region26: #{tpu_custom_call.1} parent=5 // pred_check_branch
        %180 = sbr.rel (%p178) target = $region28
      $region27: #{tpu_custom_call.1} parent=5 // pred_region
        // Predicated region
        $region29: #{tpu_custom_call.1} parent=27 // pred_check
          %p181 = pneg %p47
        $region30: #{tpu_custom_call.1} parent=27 // pred_check_branch
          %183 = sbr.rel (%p181) target = $region32
        $region31: #{tpu_custom_call.1} parent=27 // pred_region
          %s184 = smul.u32 32, %s20
          %p185 = scmp.lt.s32.totalorder %s184, 63
          %s186 = scalar_select %p185, %s184, 63
          %p187 = scmp.lt.s32.totalorder %s21, 0
          %s188 = scalar_select %p187, %s21, 0
          %s189 = sadd.s32 %s188, %s186
          %s190 = smul.addr %s189, 4
          %s191 = scalar_lea.vmem %s0, %s190
          %s192 = smul.u32 32, %s20
        $region32: #{tpu_custom_call.1} parent=27 // pred_fallthru
          _
      $region28: #{tpu_custom_call.1} parent=5 // pred_fallthru
        _
      %p193 = scmp.le.s32.totalorder 1, %s13
      %p194 = scmp.lt.s32.totalorder %s13, 3
      %p195 = pnand %p193, %p194
      %p196 = pneg %p195
      // Predicated region
      $region33: #{tpu_custom_call.1} parent=5 // pred_check
        _
      $region34: #{tpu_custom_call.1} parent=5 // pred_check_branch
        %198 = sbr.rel (%p195) target = $region36
      $region35: #{tpu_custom_call.1} parent=5 // pred_region
        %s199 = ssub.s32 %s13, 1
        %s200 = smul.u32 32, %s22
        %p201 = scmp.lt.s32.totalorder %s200, 63
        %s202 = scalar_select %p201, %s200, 63
        %p203 = scmp.lt.s32.totalorder %s23, 0
        %s204 = scalar_select %p203, %s23, 0
        %s205 = sadd.s32 %s204, %s202
        %s206 = smul.addr %s205, 4
        %s207 = scalar_lea.vmem %s0, %s206
        %p208 = pneg %p53
        %p209 = pneg %p50
        %s210 = smul.u32 9, %s23
        %p211 = scmp.lt.s32.totalorder %s210, 8
        %s212 = scalar_select %p211, %s210, 8
        %s213 = smul.addr %s212, 4
        %s214 = scalar_lea.vmem %s1, %s213
        %p215 = pneg %p79
        %p216 = pneg %p76
        %p217 = pneg %p100
        %p218 = pneg %p97
        %p219 = pneg %p121
        %p220 = pneg %p118
        %p221 = pneg %p147
        %p222 = pneg %p144
        %s223 = sand.u32 %s134, 1
        %s224 = scalar_lea.sflag [#allocation4], %s223
        %s225 = sand.u32 %s134, 1
        %s226 = smul.addr %s225, 128
        %s227 = scalar_lea.vmem [#allocation3], %s226
        %s228 = smul.u32 32, %s22
        %p229 = scmp.lt.s32.totalorder %s228, 63
        %s230 = scalar_select %p229, %s228, 63
        %p231 = scmp.lt.s32.totalorder %s23, 0
        %s232 = scalar_select %p231, %s23, 0
        %s233 = sadd.s32 %s232, %s230
        %s234 = smul.addr %s233, 4
        %s235 = scalar_lea.vmem %s0, %s234
        %s236 = smul.u32 32, %s22
        %s237 = smul.u32 9, %s23
        %p238 = scmp.lt.s32.totalorder %s237, 8
        %s239 = scalar_select %p238, %s237, 8
        %s240 = smul.addr %s239, 4
        %s241 = scalar_lea.vmem %s1, %s240
        %s242 = smul.u32 9, %s23
        %s243 = smul.u32 32, %s22
        %p245 = scmp.eq.s32.totalorder %s23, 0
        // Predicated region
        $region37: #{tpu_custom_call.1} parent=35 // pred_check
          %p246 = pneg %p245
        $region38: #{tpu_custom_call.1} parent=35 // pred_check_branch
          %248 = sbr.rel (%p246) target = $region40
        $region39: #{tpu_custom_call.1} parent=35 // pred_region
          %249 = vst [vmem:[#allocation2] sm:$0xff] 0.0
          %250 = vst [vmem:[#allocation2 + $0x8] sm:$0xff] 0.0
          %251 = vst [vmem:[#allocation2 + $0x10] sm:$0xff] 0.0
          %252 = vst [vmem:[#allocation2 + $0x18] sm:$0xff] 0.0
          %253 = vst [vmem:[#allocation2 + $0x20] sm:$0xff] 0.0
          %254 = vst [vmem:[#allocation2 + $0x28] sm:$0xff] 0.0
          %255 = vst [vmem:[#allocation2 + $0x30] sm:$0xff] 0.0
          %256 = vst [vmem:[#allocation2 + $0x38] sm:$0xff] 0.0
          %257 = vst [vmem:[#allocation2 + $0x40] sm:$0xff] 0.0
          %258 = vst [vmem:[#allocation2 + $0x48] sm:$0xff] 0.0
          %259 = vst [vmem:[#allocation2 + $0x50] sm:$0xff] 0.0
          %260 = vst [vmem:[#allocation2 + $0x58] sm:$0xff] 0.0
          %261 = vst [vmem:[#allocation2 + $0x60] sm:$0xff] 0.0
          %262 = vst [vmem:[#allocation2 + $0x68] sm:$0xff] 0.0
          %263 = vst [vmem:[#allocation2 + $0x70] sm:$0xff] 0.0
          %264 = vst [vmem:[#allocation2 + $0x78] sm:$0xff] 0.0
          %265 = vst [vmem:[#allocation2 + $0x80] sm:$0xff] 0.0
          %266 = vst [vmem:[#allocation2 + $0x88] sm:$0xff] 0.0
          %267 = vst [vmem:[#allocation2 + $0x90] sm:$0xff] 0.0
          %268 = vst [vmem:[#allocation2 + $0x98] sm:$0xff] 0.0
          %269 = vst [vmem:[#allocation2 + $0xa0] sm:$0xff] 0.0
          %270 = vst [vmem:[#allocation2 + $0xa8] sm:$0xff] 0.0
          %271 = vst [vmem:[#allocation2 + $0xb0] sm:$0xff] 0.0
          %272 = vst [vmem:[#allocation2 + $0xb8] sm:$0xff] 0.0
          %273 = vst [vmem:[#allocation2 + $0xc0] sm:$0xff] 0.0
          %274 = vst [vmem:[#allocation2 + $0xc8] sm:$0xff] 0.0
          %275 = vst [vmem:[#allocation2 + $0xd0] sm:$0xff] 0.0
          %276 = vst [vmem:[#allocation2 + $0xd8] sm:$0xff] 0.0
          %277 = vst [vmem:[#allocation2 + $0xe0] sm:$0xff] 0.0
          %278 = vst [vmem:[#allocation2 + $0xe8] sm:$0xff] 0.0
          %279 = vst [vmem:[#allocation2 + $0xf0] sm:$0xff] 0.0
          %280 = vst [vmem:[#allocation2 + $0xf8] sm:$0xff] 0.0
        $region40: #{tpu_custom_call.1} parent=35 // pred_fallthru
          _
        %v281 = vld [vmem:[#allocation2] sm:$0xff]
        %v282 = vld [vmem:[#allocation2 + $0x8] sm:$0xff]
        %v283 = vld [vmem:[#allocation2 + $0x10] sm:$0xff]
        %v284 = vld [vmem:[#allocation2 + $0x18] sm:$0xff]
        %v285 = vld [vmem:[#allocation2 + $0x20] sm:$0xff]
        %v286 = vld [vmem:[#allocation2 + $0x28] sm:$0xff]
        %v287 = vld [vmem:[#allocation2 + $0x30] sm:$0xff]
        %v288 = vld [vmem:[#allocation2 + $0x38] sm:$0xff]
        %v289 = vld [vmem:[#allocation2 + $0x40] sm:$0xff]
        %v290 = vld [vmem:[#allocation2 + $0x48] sm:$0xff]
        %v291 = vld [vmem:[#allocation2 + $0x50] sm:$0xff]
        %v292 = vld [vmem:[#allocation2 + $0x58] sm:$0xff]
        %v293 = vld [vmem:[#allocation2 + $0x60] sm:$0xff]
        %v294 = vld [vmem:[#allocation2 + $0x68] sm:$0xff]
        %v295 = vld [vmem:[#allocation2 + $0x70] sm:$0xff]
        %v296 = vld [vmem:[#allocation2 + $0x78] sm:$0xff]
        %v297 = vld [vmem:[#allocation2 + $0x80] sm:$0xff]
        %v298 = vld [vmem:[#allocation2 + $0x88] sm:$0xff]
        %v299 = vld [vmem:[#allocation2 + $0x90] sm:$0xff]
        %v300 = vld [vmem:[#allocation2 + $0x98] sm:$0xff]
        %v301 = vld [vmem:[#allocation2 + $0xa0] sm:$0xff]
        %v302 = vld [vmem:[#allocation2 + $0xa8] sm:$0xff]
        %v303 = vld [vmem:[#allocation2 + $0xb0] sm:$0xff]
        %v304 = vld [vmem:[#allocation2 + $0xb8] sm:$0xff]
        %v305 = vld [vmem:[#allocation2 + $0xc0] sm:$0xff]
        %v306 = vld [vmem:[#allocation2 + $0xc8] sm:$0xff]
        %v307 = vld [vmem:[#allocation2 + $0xd0] sm:$0xff]
        %v308 = vld [vmem:[#allocation2 + $0xd8] sm:$0xff]
        %v309 = vld [vmem:[#allocation2 + $0xe0] sm:$0xff]
        %v310 = vld [vmem:[#allocation2 + $0xe8] sm:$0xff]
        %v311 = vld [vmem:[#allocation2 + $0xf0] sm:$0xff]
        %v312 = vld [vmem:[#allocation2 + $0xf8] sm:$0xff]
        %v313 = vld [vmem:[%s235] sm:$0xf]
        %v314 = vld [vmem:[%s235 + $0x4] sm:$0xf]
        %v315 = vld [vmem:[%s235 + $0x8] sm:$0xf]
        %v316 = vld [vmem:[%s235 + $0xc] sm:$0xf]
        %v317 = vld [vmem:[%s235 + $0x10] sm:$0xf]
        %v318 = vld [vmem:[%s235 + $0x14] sm:$0xf]
        %v319 = vld [vmem:[%s235 + $0x18] sm:$0xf]
        %v320 = vld [vmem:[%s235 + $0x1c] sm:$0xf]
        %v321 = vld [vmem:[%s235 + $0x20] sm:$0xf]
        %v322 = vld [vmem:[%s235 + $0x24] sm:$0xf]
        %v323 = vld [vmem:[%s235 + $0x28] sm:$0xf]
        %v324 = vld [vmem:[%s235 + $0x2c] sm:$0xf]
        %v325 = vld [vmem:[%s235 + $0x30] sm:$0xf]
        %v326 = vld [vmem:[%s235 + $0x34] sm:$0xf]
        %v327 = vld [vmem:[%s235 + $0x38] sm:$0xf]
        %v328 = vld [vmem:[%s235 + $0x3c] sm:$0xf]
        %v329 = vld [vmem:[%s235 + $0x40] sm:$0xf]
        %v330 = vld [vmem:[%s235 + $0x44] sm:$0xf]
        %v331 = vld [vmem:[%s235 + $0x48] sm:$0xf]
        %v332 = vld [vmem:[%s235 + $0x4c] sm:$0xf]
        %v333 = vld [vmem:[%s235 + $0x50] sm:$0xf]
        %v334 = vld [vmem:[%s235 + $0x54] sm:$0xf]
        %v335 = vld [vmem:[%s235 + $0x58] sm:$0xf]
        %v336 = vld [vmem:[%s235 + $0x5c] sm:$0xf]
        %v337 = vld [vmem:[%s235 + $0x60] sm:$0xf]
        %v338 = vld [vmem:[%s235 + $0x64] sm:$0xf]
        %v339 = vld [vmem:[%s235 + $0x68] sm:$0xf]
        %v340 = vld [vmem:[%s235 + $0x6c] sm:$0xf]
        %v341 = vld [vmem:[%s235 + $0x70] sm:$0xf]
        %v342 = vld [vmem:[%s235 + $0x74] sm:$0xf]
        %v343 = vld [vmem:[%s235 + $0x78] sm:$0xf]
        %v344 = vld [vmem:[%s235 + $0x7c] sm:$0xf]
        %v345 = vld [vmem:[%s241] sm:$0xf]
        %v346 = vld [vmem:[%s241 + $0x4] sm:$0xf]
        %v347 = vld [vmem:[%s241 + $0x8] sm:$0xf]
        %v348 = vld [vmem:[%s241 + $0xc] sm:$0xf]
        %v349 = vld [vmem:[%s241 + $0x10] sm:$0xf]
        %v350 = vld [vmem:[%s241 + $0x14] sm:$0xf]
        %v351 = vld [vmem:[%s241 + $0x18] sm:$0xf]
        %v352 = vld [vmem:[%s241 + $0x1c] sm:$0xf]
        %v353 = vld [vmem:[%s241 + $0x20] sm:$0xf]
        %v386 = vunpack.c.l.b16 %v313
        %v387 = vunpack.c.l.b16 %v314
        %v388 = vunpack.c.l.b16 %v315
        %v389 = vunpack.c.l.b16 %v316
        %v390 = vunpack.c.l.b16 %v317
        %v391 = vunpack.c.l.b16 %v318
        %v392 = vunpack.c.l.b16 %v319
        %v393 = vunpack.c.l.b16 %v320
        %v394 = vunpack.c.l.b16 %v321
        %v395 = vunpack.c.l.b16 %v322
        %v396 = vunpack.c.l.b16 %v323
        %v397 = vunpack.c.l.b16 %v324
        %v398 = vunpack.c.l.b16 %v325
        %v399 = vunpack.c.l.b16 %v326
        %v400 = vunpack.c.l.b16 %v327
        %v401 = vunpack.c.l.b16 %v328
        %v402 = vunpack.c.l.b16 %v329
        %v403 = vunpack.c.l.b16 %v330
        %v404 = vunpack.c.l.b16 %v331
        %v405 = vunpack.c.l.b16 %v332
        %v406 = vunpack.c.l.b16 %v333
        %v407 = vunpack.c.l.b16 %v334
        %v408 = vunpack.c.l.b16 %v335
        %v409 = vunpack.c.l.b16 %v336
        %v410 = vunpack.c.l.b16 %v337
        %v411 = vunpack.c.l.b16 %v338
        %v412 = vunpack.c.l.b16 %v339
        %v413 = vunpack.c.l.b16 %v340
        %v414 = vunpack.c.l.b16 %v341
        %v415 = vunpack.c.l.b16 %v342
        %v416 = vunpack.c.l.b16 %v343
        %v417 = vunpack.c.l.b16 %v344
        %v418 = vpack.c.b16 %v387, %v386
        %v419 = vpack.c.b16 %v389, %v388
        %v420 = vpack.c.b16 %v391, %v390
        %v421 = vpack.c.b16 %v393, %v392
        %v422 = vpack.c.b16 %v395, %v394
        %v423 = vpack.c.b16 %v397, %v396
        %v424 = vpack.c.b16 %v399, %v398
        %v425 = vpack.c.b16 %v401, %v400
        %v426 = vpack.c.b16 %v403, %v402
        %v427 = vpack.c.b16 %v405, %v404
        %v428 = vpack.c.b16 %v407, %v406
        %v429 = vpack.c.b16 %v409, %v408
        %v430 = vpack.c.b16 %v411, %v410
        %v431 = vpack.c.b16 %v413, %v412
        %v432 = vpack.c.b16 %v415, %v414
        %v433 = vpack.c.b16 %v417, %v416
        %v443 = vunpack.c.l.b16 %v345
        %v444 = vunpack.c.l.b16 %v346
        %v445 = vunpack.c.l.b16 %v347
        %v446 = vunpack.c.l.b16 %v348
        %v447 = vunpack.c.l.b16 %v349
        %v448 = vunpack.c.l.b16 %v350
        %v449 = vunpack.c.l.b16 %v351
        %v450 = vunpack.c.l.b16 %v352
        %v451 = vunpack.c.l.b16 %v353
        %v452 = vpack.c.b16 %v444, %v443
        %v453 = vpack.c.b16 %v446, %v445
        %v454 = vpack.c.b16 %v448, %v447
        %v455 = vpack.c.b16 %v450, %v449
        %v456 = vpack.c.b16 %v451, %v451
        %vm461 = vcmask 588800
        %v463 = vsel %vm461, %v418, 0
        %v466 = vsel %vm461, %v419, 0
        %v469 = vsel %vm461, %v420, 0
        %v472 = vsel %vm461, %v421, 0
        %v475 = vsel %vm461, %v422, 0
        %v478 = vsel %vm461, %v423, 0
        %v481 = vsel %vm461, %v424, 0
        %v484 = vsel %vm461, %v425, 0
        %v487 = vsel %vm461, %v426, 0
        %v490 = vsel %vm461, %v427, 0
        %v493 = vsel %vm461, %v428, 0
        %v496 = vsel %vm461, %v429, 0
        %v499 = vsel %vm461, %v430, 0
        %v502 = vsel %vm461, %v431, 0
        %v505 = vsel %vm461, %v432, 0
        %v508 = vsel %vm461, %v433, 0
        %vm510 = vcmask 1043456
        %v512 = vsel %vm510, %v456, 0
        %514 = vmatprep.subr.bf16.mxu0 0
        %515 = vmatpush1.bf16.msra.mxu0 %v452
        %516 = vmatprep.subr.bf16.mxu0 0
        %517 = vmatpush1.bf16.msra.mxu0 %v453
        %518 = vmatprep.subr.bf16.mxu0 0
        %519 = vmatpush1.bf16.msra.mxu0 %v454
        %520 = vmatprep.subr.bf16.mxu0 0
        %521 = vmatpush1.bf16.msra.mxu0 %v455
        %522 = vmatprep.subr.bf16.mxu0 0
        %523 = vmatpush1.bf16.msra.mxu0 %v512
        %524 = vmatprep.subr.bf16.mxu0 0
        %525 = vmatpush1.bf16.msra.mxu0 0
        %526 = vmatprep.subr.bf16.mxu0 0
        %527 = vmatpush1.bf16.msra.mxu0 0
        %528 = vmatprep.subr.bf16.mxu0 0
        %529 = vmatpush1.bf16.msra.mxu0 0
        %530 = vmatprep.subr.bf16.mxu0 0
        %531 = vmatpush1.bf16.msra.mxu0 0
        %532 = vmatprep.subr.bf16.mxu0 0
        %533 = vmatpush1.bf16.msra.mxu0 0
        %534 = vmatprep.subr.bf16.mxu0 0
        %535 = vmatpush1.bf16.msra.mxu0 0
        %536 = vmatprep.subr.bf16.mxu0 0
        %537 = vmatpush1.bf16.msra.mxu0 0
        %538 = vmatprep.subr.bf16.mxu0 0
        %539 = vmatpush1.bf16.msra.mxu0 0
        %540 = vmatprep.subr.bf16.mxu0 0
        %541 = vmatpush1.bf16.msra.mxu0 0
        %542 = vmatprep.subr.bf16.mxu0 0
        %543 = vmatpush1.bf16.msra.mxu0 0
        %544 = vmatprep.subr.bf16.mxu0 0
        %545 = vmatpush1.bf16.msra.mxu0 0
        %546 = vmatprep.mubr.bf16.mxu0 0
        %547 = vmatmul.mubr.bf16.gmra.mrb[0].mxu0 %v463
        %v548 = vpop.f32.mrb[0].mxu0
        %v549 = vadd.f32 0.0, %v548
        %v550 = vpop.f32.mrb[0].mxu0
        %v551 = vpop.f32.mrb[0].mxu0
        %v552 = vadd.f32 0.0, %v551
        %v553 = vpop.f32.mrb[0].mxu0
        %554 = vmatprep.mubr.bf16.mxu0 0
        %555 = vmatmul.mubr.bf16.gmra.mrb[0].mxu0 %v466
        %v556 = vpop.f32.mrb[0].mxu0
        %v557 = vadd.f32 0.0, %v556
        %v558 = vpop.f32.mrb[0].mxu0
        %v559 = vpop.f32.mrb[0].mxu0
        %v560 = vadd.f32 0.0, %v559
        %v561 = vpop.f32.mrb[0].mxu0
        %562 = vmatprep.mubr.bf16.mxu0 0
        %563 = vmatmul.mubr.bf16.gmra.mrb[0].mxu0 %v469
        %v564 = vpop.f32.mrb[0].mxu0
        %v565 = vadd.f32 0.0, %v564
        %v566 = vpop.f32.mrb[0].mxu0
        %v567 = vpop.f32.mrb[0].mxu0
        %v568 = vadd.f32 0.0, %v567
        %v569 = vpop.f32.mrb[0].mxu0
        %570 = vmatprep.mubr.bf16.mxu0 0
        %571 = vmatmul.mubr.bf16.gmra.mrb[0].mxu0 %v472
        %v572 = vpop.f32.mrb[0].mxu0
        %v573 = vadd.f32 0.0, %v572
        %v574 = vpop.f32.mrb[0].mxu0
        %v575 = vpop.f32.mrb[0].mxu0
        %v576 = vadd.f32 0.0, %v575
        %v577 = vpop.f32.mrb[0].mxu0
        %578 = vmatprep.mubr.bf16.mxu0 0
        %579 = vmatmul.mubr.bf16.gmra.mrb[0].mxu0 %v475
        %v580 = vpop.f32.mrb[0].mxu0
        %v581 = vadd.f32 0.0, %v580
        %v582 = vpop.f32.mrb[0].mxu0
        %v583 = vpop.f32.mrb[0].mxu0
        %v584 = vadd.f32 0.0, %v583
        %v585 = vpop.f32.mrb[0].mxu0
        %586 = vmatprep.mubr.bf16.mxu0 0
        %587 = vmatmul.mubr.bf16.gmra.mrb[0].mxu0 %v478
        %v588 = vpop.f32.mrb[0].mxu0
        %v589 = vadd.f32 0.0, %v588
        %v590 = vpop.f32.mrb[0].mxu0
        %v591 = vpop.f32.mrb[0].mxu0
        %v592 = vadd.f32 0.0, %v591
        %v593 = vpop.f32.mrb[0].mxu0
        %594 = vmatprep.mubr.bf16.mxu0 0
        %595 = vmatmul.mubr.bf16.gmra.mrb[0].mxu0 %v481
        %v596 = vpop.f32.mrb[0].mxu0
        %v597 = vadd.f32 0.0, %v596
        %v598 = vpop.f32.mrb[0].mxu0
        %v599 = vpop.f32.mrb[0].mxu0
        %v600 = vadd.f32 0.0, %v599
        %v601 = vpop.f32.mrb[0].mxu0
        %602 = vmatprep.mubr.bf16.mxu0 0
        %603 = vmatmul.mubr.bf16.gmra.mrb[0].mxu0 %v484
        %v604 = vpop.f32.mrb[0].mxu0
        %v605 = vadd.f32 0.0, %v604
        %v606 = vpop.f32.mrb[0].mxu0
        %v607 = vpop.f32.mrb[0].mxu0
        %v608 = vadd.f32 0.0, %v607
        %v609 = vpop.f32.mrb[0].mxu0
        %610 = vmatprep.mubr.bf16.mxu0 0
        %611 = vmatmul.mubr.bf16.gmra.mrb[0].mxu0 %v487
        %v612 = vpop.f32.mrb[0].mxu0
        %v613 = vadd.f32 0.0, %v612
        %v614 = vpop.f32.mrb[0].mxu0
        %v615 = vpop.f32.mrb[0].mxu0
        %v616 = vadd.f32 0.0, %v615
        %v617 = vpop.f32.mrb[0].mxu0
        %618 = vmatprep.mubr.bf16.mxu0 0
        %619 = vmatmul.mubr.bf16.gmra.mrb[0].mxu0 %v490
        %v620 = vpop.f32.mrb[0].mxu0
        %v621 = vadd.f32 0.0, %v620
        %v622 = vpop.f32.mrb[0].mxu0
        %v623 = vpop.f32.mrb[0].mxu0
        %v624 = vadd.f32 0.0, %v623
        %v625 = vpop.f32.mrb[0].mxu0
        %626 = vmatprep.mubr.bf16.mxu0 0
        %627 = vmatmul.mubr.bf16.gmra.mrb[0].mxu0 %v493
        %v628 = vpop.f32.mrb[0].mxu0
        %v629 = vadd.f32 0.0, %v628
        %v630 = vpop.f32.mrb[0].mxu0
        %v631 = vpop.f32.mrb[0].mxu0
        %v632 = vadd.f32 0.0, %v631
        %v633 = vpop.f32.mrb[0].mxu0
        %634 = vmatprep.mubr.bf16.mxu0 0
        %635 = vmatmul.mubr.bf16.gmra.mrb[0].mxu0 %v496
        %v636 = vpop.f32.mrb[0].mxu0
        %v637 = vadd.f32 0.0, %v636
        %v638 = vpop.f32.mrb[0].mxu0
        %v639 = vpop.f32.mrb[0].mxu0
        %v640 = vadd.f32 0.0, %v639
        %v641 = vpop.f32.mrb[0].mxu0
        %642 = vmatprep.mubr.bf16.mxu0 0
        %643 = vmatmul.mubr.bf16.gmra.mrb[0].mxu0 %v499
        %v644 = vpop.f32.mrb[0].mxu0
        %v645 = vadd.f32 0.0, %v644
        %v646 = vpop.f32.mrb[0].mxu0
        %v647 = vpop.f32.mrb[0].mxu0
        %v648 = vadd.f32 0.0, %v647
        %v649 = vpop.f32.mrb[0].mxu0
        %650 = vmatprep.mubr.bf16.mxu0 0
        %651 = vmatmul.mubr.bf16.gmra.mrb[0].mxu0 %v502
        %v652 = vpop.f32.mrb[0].mxu0
        %v653 = vadd.f32 0.0, %v652
        %v654 = vpop.f32.mrb[0].mxu0
        %v655 = vpop.f32.mrb[0].mxu0
        %v656 = vadd.f32 0.0, %v655
        %v657 = vpop.f32.mrb[0].mxu0
        %658 = vmatprep.mubr.bf16.mxu0 0
        %659 = vmatmul.mubr.bf16.gmra.mrb[0].mxu0 %v505
        %v660 = vpop.f32.mrb[0].mxu0
        %v661 = vadd.f32 0.0, %v660
        %v662 = vpop.f32.mrb[0].mxu0
        %v663 = vpop.f32.mrb[0].mxu0
        %v664 = vadd.f32 0.0, %v663
        %v665 = vpop.f32.mrb[0].mxu0
        %666 = vmatprep.mubr.bf16.mxu0 0
        %667 = vmatmul.mubr.bf16.gmra.mrb[0].mxu0 %v508
        %v668 = vpop.f32.mrb[0].mxu0
        %v669 = vadd.f32 0.0, %v668
        %v670 = vpop.f32.mrb[0].mxu0
        %v671 = vpop.f32.mrb[0].mxu0
        %v672 = vadd.f32 0.0, %v671
        %v673 = vpop.f32.mrb[0].mxu0
        %674 = vdwg.mxu0
        %v675 = vadd.f32 %v281, %v549
        %v676 = vadd.f32 %v282, %v552
        %v677 = vadd.f32 %v283, %v557
        %v678 = vadd.f32 %v284, %v560
        %v679 = vadd.f32 %v285, %v565
        %v680 = vadd.f32 %v286, %v568
        %v681 = vadd.f32 %v287, %v573
        %v682 = vadd.f32 %v288, %v576
        %v683 = vadd.f32 %v289, %v581
        %v684 = vadd.f32 %v290, %v584
        %v685 = vadd.f32 %v291, %v589
        %v686 = vadd.f32 %v292, %v592
        %v687 = vadd.f32 %v293, %v597
        %v688 = vadd.f32 %v294, %v600
        %v689 = vadd.f32 %v295, %v605
        %v690 = vadd.f32 %v296, %v608
        %v691 = vadd.f32 %v297, %v613
        %v692 = vadd.f32 %v298, %v616
        %v693 = vadd.f32 %v299, %v621
        %v694 = vadd.f32 %v300, %v624
        %v695 = vadd.f32 %v301, %v629
        %v696 = vadd.f32 %v302, %v632
        %v697 = vadd.f32 %v303, %v637
        %v698 = vadd.f32 %v304, %v640
        %v699 = vadd.f32 %v305, %v645
        %v700 = vadd.f32 %v306, %v648
        %v701 = vadd.f32 %v307, %v653
        %v702 = vadd.f32 %v308, %v656
        %v703 = vadd.f32 %v309, %v661
        %v704 = vadd.f32 %v310, %v664
        %v705 = vadd.f32 %v311, %v669
        %v706 = vadd.f32 %v312, %v672
        %707 = vst [vmem:[#allocation2] sm:$0xff] %v675
        %708 = vst [vmem:[#allocation2 + $0x8] sm:$0xff] %v676
        %709 = vst [vmem:[#allocation2 + $0x10] sm:$0xff] %v677
        %710 = vst [vmem:[#allocation2 + $0x18] sm:$0xff] %v678
        %711 = vst [vmem:[#allocation2 + $0x20] sm:$0xff] %v679
        %712 = vst [vmem:[#allocation2 + $0x28] sm:$0xff] %v680
        %713 = vst [vmem:[#allocation2 + $0x30] sm:$0xff] %v681
        %714 = vst [vmem:[#allocation2 + $0x38] sm:$0xff] %v682
        %715 = vst [vmem:[#allocation2 + $0x40] sm:$0xff] %v683
        %716 = vst [vmem:[#allocation2 + $0x48] sm:$0xff] %v684
        %717 = vst [vmem:[#allocation2 + $0x50] sm:$0xff] %v685
        %718 = vst [vmem:[#allocation2 + $0x58] sm:$0xff] %v686
        %719 = vst [vmem:[#allocation2 + $0x60] sm:$0xff] %v687
        %720 = vst [vmem:[#allocation2 + $0x68] sm:$0xff] %v688
        %721 = vst [vmem:[#allocation2 + $0x70] sm:$0xff] %v689
        %722 = vst [vmem:[#allocation2 + $0x78] sm:$0xff] %v690
        %723 = vst [vmem:[#allocation2 + $0x80] sm:$0xff] %v691
        %724 = vst [vmem:[#allocation2 + $0x88] sm:$0xff] %v692
        %725 = vst [vmem:[#allocation2 + $0x90] sm:$0xff] %v693
        %726 = vst [vmem:[#allocation2 + $0x98] sm:$0xff] %v694
        %727 = vst [vmem:[#allocation2 + $0xa0] sm:$0xff] %v695
        %728 = vst [vmem:[#allocation2 + $0xa8] sm:$0xff] %v696
        %729 = vst [vmem:[#allocation2 + $0xb0] sm:$0xff] %v697
        %730 = vst [vmem:[#allocation2 + $0xb8] sm:$0xff] %v698
        %731 = vst [vmem:[#allocation2 + $0xc0] sm:$0xff] %v699
        %732 = vst [vmem:[#allocation2 + $0xc8] sm:$0xff] %v700
        %733 = vst [vmem:[#allocation2 + $0xd0] sm:$0xff] %v701
        %734 = vst [vmem:[#allocation2 + $0xd8] sm:$0xff] %v702
        %735 = vst [vmem:[#allocation2 + $0xe0] sm:$0xff] %v703
        %736 = vst [vmem:[#allocation2 + $0xe8] sm:$0xff] %v704
        %737 = vst [vmem:[#allocation2 + $0xf0] sm:$0xff] %v705
        %738 = vst [vmem:[#allocation2 + $0xf8] sm:$0xff] %v706
        // Predicated region
        $region41: #{tpu_custom_call.1} parent=35 // pred_check
          %p739 = pneg %p245
        $region42: #{tpu_custom_call.1} parent=35 // pred_check_branch
          %741 = sbr.rel (%p739) target = $region44
        $region43: #{tpu_custom_call.1} parent=35 // pred_region
          %v742 = vld [vmem:[#allocation2] sm:$0xff]
          %v743 = vld [vmem:[#allocation2 + $0x8] sm:$0xff]
          %v744 = vld [vmem:[#allocation2 + $0x10] sm:$0xff]
          %v745 = vld [vmem:[#allocation2 + $0x18] sm:$0xff]
          %v746 = vld [vmem:[#allocation2 + $0x20] sm:$0xff]
          %v747 = vld [vmem:[#allocation2 + $0x28] sm:$0xff]
          %v748 = vld [vmem:[#allocation2 + $0x30] sm:$0xff]
          %v749 = vld [vmem:[#allocation2 + $0x38] sm:$0xff]
          %v750 = vld [vmem:[#allocation2 + $0x40] sm:$0xff]
          %v751 = vld [vmem:[#allocation2 + $0x48] sm:$0xff]
          %v752 = vld [vmem:[#allocation2 + $0x50] sm:$0xff]
          %v753 = vld [vmem:[#allocation2 + $0x58] sm:$0xff]
          %v754 = vld [vmem:[#allocation2 + $0x60] sm:$0xff]
          %v755 = vld [vmem:[#allocation2 + $0x68] sm:$0xff]
          %v756 = vld [vmem:[#allocation2 + $0x70] sm:$0xff]
          %v757 = vld [vmem:[#allocation2 + $0x78] sm:$0xff]
          %v758 = vld [vmem:[#allocation2 + $0x80] sm:$0xff]
          %v759 = vld [vmem:[#allocation2 + $0x88] sm:$0xff]
          %v760 = vld [vmem:[#allocation2 + $0x90] sm:$0xff]
          %v761 = vld [vmem:[#allocation2 + $0x98] sm:$0xff]
          %v762 = vld [vmem:[#allocation2 + $0xa0] sm:$0xff]
          %v763 = vld [vmem:[#allocation2 + $0xa8] sm:$0xff]
          %v764 = vld [vmem:[#allocation2 + $0xb0] sm:$0xff]
          %v765 = vld [vmem:[#allocation2 + $0xb8] sm:$0xff]
          %v766 = vld [vmem:[#allocation2 + $0xc0] sm:$0xff]
          %v767 = vld [vmem:[#allocation2 + $0xc8] sm:$0xff]
          %v768 = vld [vmem:[#allocation2 + $0xd0] sm:$0xff]
          %v769 = vld [vmem:[#allocation2 + $0xd8] sm:$0xff]
          %v770 = vld [vmem:[#allocation2 + $0xe0] sm:$0xff]
          %v771 = vld [vmem:[#allocation2 + $0xe8] sm:$0xff]
          %v772 = vld [vmem:[#allocation2 + $0xf0] sm:$0xff]
          %v773 = vld [vmem:[#allocation2 + $0xf8] sm:$0xff]
          %v774 = vld [vmem:[%s2] sm:$0x1]
          %v776 = vlaneseq
          %v777 = vshrl.u32 %v776, 7
          %v778 = vsub.s32 0, %v777
          %v779 = vrot.slane %v774, %v778
          %v781 = vmul.f32 %v742, %v779
          %v782 = vmul.f32 %v743, %v779
          %v783 = vmul.f32 %v744, %v779
          %v784 = vmul.f32 %v745, %v779
          %v785 = vmul.f32 %v746, %v779
          %v786 = vmul.f32 %v747, %v779
          %v787 = vmul.f32 %v748, %v779
          %v788 = vmul.f32 %v749, %v779
          %v789 = vmul.f32 %v750, %v779
          %v790 = vmul.f32 %v751, %v779
          %v791 = vmul.f32 %v752, %v779
          %v792 = vmul.f32 %v753, %v779
          %v793 = vmul.f32 %v754, %v779
          %v794 = vmul.f32 %v755, %v779
          %v795 = vmul.f32 %v756, %v779
          %v796 = vmul.f32 %v757, %v779
          %v797 = vmul.f32 %v758, %v779
          %v798 = vmul.f32 %v759, %v779
          %v799 = vmul.f32 %v760, %v779
          %v800 = vmul.f32 %v761, %v779
          %v801 = vmul.f32 %v762, %v779
          %v802 = vmul.f32 %v763, %v779
          %v803 = vmul.f32 %v764, %v779
          %v804 = vmul.f32 %v765, %v779
          %v805 = vmul.f32 %v766, %v779
          %v806 = vmul.f32 %v767, %v779
          %v807 = vmul.f32 %v768, %v779
          %v808 = vmul.f32 %v769, %v779
          %v809 = vmul.f32 %v770, %v779
          %v810 = vmul.f32 %v771, %v779
          %v811 = vmul.f32 %v772, %v779
          %v812 = vmul.f32 %v773, %v779
          %v813 = vld [vmem:[%s3] sm:$0x1]
          %v815 = vlaneseq
          %v816 = vshrl.u32 %v815, 7
          %v817 = vsub.s32 0, %v816
          %v818 = vrot.slane %v813, %v817
          %v820 = vadd.f32 %v781, %v818
          %v821 = vadd.f32 %v782, %v818
          %v822 = vadd.f32 %v783, %v818
          %v823 = vadd.f32 %v784, %v818
          %v824 = vadd.f32 %v785, %v818
          %v825 = vadd.f32 %v786, %v818
          %v826 = vadd.f32 %v787, %v818
          %v827 = vadd.f32 %v788, %v818
          %v828 = vadd.f32 %v789, %v818
          %v829 = vadd.f32 %v790, %v818
          %v830 = vadd.f32 %v791, %v818
          %v831 = vadd.f32 %v792, %v818
          %v832 = vadd.f32 %v793, %v818
          %v833 = vadd.f32 %v794, %v818
          %v834 = vadd.f32 %v795, %v818
          %v835 = vadd.f32 %v796, %v818
          %v836 = vadd.f32 %v797, %v818
          %v837 = vadd.f32 %v798, %v818
          %v838 = vadd.f32 %v799, %v818
          %v839 = vadd.f32 %v800, %v818
          %v840 = vadd.f32 %v801, %v818
          %v841 = vadd.f32 %v802, %v818
          %v842 = vadd.f32 %v803, %v818
          %v843 = vadd.f32 %v804, %v818
          %v844 = vadd.f32 %v805, %v818
          %v845 = vadd.f32 %v806, %v818
          %v846 = vadd.f32 %v807, %v818
          %v847 = vadd.f32 %v808, %v818
          %v848 = vadd.f32 %v809, %v818
          %v849 = vadd.f32 %v810, %v818
          %v850 = vadd.f32 %v811, %v818
          %v851 = vadd.f32 %v812, %v818
          %v852 = vmax.f32 %v820, 0.0
          %v853 = vmax.f32 %v821, 0.0
          %v854 = vmax.f32 %v822, 0.0
          %v855 = vmax.f32 %v823, 0.0
          %v856 = vmax.f32 %v824, 0.0
          %v857 = vmax.f32 %v825, 0.0
          %v858 = vmax.f32 %v826, 0.0
          %v859 = vmax.f32 %v827, 0.0
          %v860 = vmax.f32 %v828, 0.0
          %v861 = vmax.f32 %v829, 0.0
          %v862 = vmax.f32 %v830, 0.0
          %v863 = vmax.f32 %v831, 0.0
          %v864 = vmax.f32 %v832, 0.0
          %v865 = vmax.f32 %v833, 0.0
          %v866 = vmax.f32 %v834, 0.0
          %v867 = vmax.f32 %v835, 0.0
          %v868 = vmax.f32 %v836, 0.0
          %v869 = vmax.f32 %v837, 0.0
          %v870 = vmax.f32 %v838, 0.0
          %v871 = vmax.f32 %v839, 0.0
          %v872 = vmax.f32 %v840, 0.0
          %v873 = vmax.f32 %v841, 0.0
          %v874 = vmax.f32 %v842, 0.0
          %v875 = vmax.f32 %v843, 0.0
          %v876 = vmax.f32 %v844, 0.0
          %v877 = vmax.f32 %v845, 0.0
          %v878 = vmax.f32 %v846, 0.0
          %v879 = vmax.f32 %v847, 0.0
          %v880 = vmax.f32 %v848, 0.0
          %v881 = vmax.f32 %v849, 0.0
          %v882 = vmax.f32 %v850, 0.0
          %v883 = vmax.f32 %v851, 0.0
          %v884 = vpack.c.bf16 %v853, %v852
          %v885 = vpack.c.bf16 %v855, %v854
          %v886 = vpack.c.bf16 %v857, %v856
          %v887 = vpack.c.bf16 %v859, %v858
          %v888 = vpack.c.bf16 %v861, %v860
          %v889 = vpack.c.bf16 %v863, %v862
          %v890 = vpack.c.bf16 %v865, %v864
          %v891 = vpack.c.bf16 %v867, %v866
          %v892 = vpack.c.bf16 %v869, %v868
          %v893 = vpack.c.bf16 %v871, %v870
          %v894 = vpack.c.bf16 %v873, %v872
          %v895 = vpack.c.bf16 %v875, %v874
          %v896 = vpack.c.bf16 %v877, %v876
          %v897 = vpack.c.bf16 %v879, %v878
          %v898 = vpack.c.bf16 %v881, %v880
          %v899 = vpack.c.bf16 %v883, %v882
          %v916 = vunpack.c.l.b16 %v884
          %v917 = vunpack.c.h.b16 %v884
          %v918 = vunpack.c.l.b16 %v885
          %v919 = vunpack.c.h.b16 %v885
          %v920 = vunpack.c.l.b16 %v886
          %v921 = vunpack.c.h.b16 %v886
          %v922 = vunpack.c.l.b16 %v887
          %v923 = vunpack.c.h.b16 %v887
          %v924 = vunpack.c.l.b16 %v888
          %v925 = vunpack.c.h.b16 %v888
          %v926 = vunpack.c.l.b16 %v889
          %v927 = vunpack.c.h.b16 %v889
          %v928 = vunpack.c.l.b16 %v890
          %v929 = vunpack.c.h.b16 %v890
          %v930 = vunpack.c.l.b16 %v891
          %v931 = vunpack.c.h.b16 %v891
          %v932 = vunpack.c.l.b16 %v892
          %v933 = vunpack.c.h.b16 %v892
          %v934 = vunpack.c.l.b16 %v893
          %v935 = vunpack.c.h.b16 %v893
          %v936 = vunpack.c.l.b16 %v894
          %v937 = vunpack.c.h.b16 %v894
          %v938 = vunpack.c.l.b16 %v895
          %v939 = vunpack.c.h.b16 %v895
          %v940 = vunpack.c.l.b16 %v896
          %v941 = vunpack.c.h.b16 %v896
          %v942 = vunpack.c.l.b16 %v897
          %v943 = vunpack.c.h.b16 %v897
          %v944 = vunpack.c.l.b16 %v898
          %v945 = vunpack.c.h.b16 %v898
          %v946 = vunpack.c.l.b16 %v899
          %v947 = vunpack.c.h.b16 %v899
          %v948 = vpack.c.b16 %v916, %v916
          %v949 = vpack.c.b16 %v917, %v917
          %v950 = vpack.c.b16 %v918, %v918
          %v951 = vpack.c.b16 %v919, %v919
          %v952 = vpack.c.b16 %v920, %v920
          %v953 = vpack.c.b16 %v921, %v921
          %v954 = vpack.c.b16 %v922, %v922
          %v955 = vpack.c.b16 %v923, %v923
          %v956 = vpack.c.b16 %v924, %v924
          %v957 = vpack.c.b16 %v925, %v925
          %v958 = vpack.c.b16 %v926, %v926
          %v959 = vpack.c.b16 %v927, %v927
          %v960 = vpack.c.b16 %v928, %v928
          %v961 = vpack.c.b16 %v929, %v929
          %v962 = vpack.c.b16 %v930, %v930
          %v963 = vpack.c.b16 %v931, %v931
          %v964 = vpack.c.b16 %v932, %v932
          %v965 = vpack.c.b16 %v933, %v933
          %v966 = vpack.c.b16 %v934, %v934
          %v967 = vpack.c.b16 %v935, %v935
          %v968 = vpack.c.b16 %v936, %v936
          %v969 = vpack.c.b16 %v937, %v937
          %v970 = vpack.c.b16 %v938, %v938
          %v971 = vpack.c.b16 %v939, %v939
          %v972 = vpack.c.b16 %v940, %v940
          %v973 = vpack.c.b16 %v941, %v941
          %v974 = vpack.c.b16 %v942, %v942
          %v975 = vpack.c.b16 %v943, %v943
          %v976 = vpack.c.b16 %v944, %v944
          %v977 = vpack.c.b16 %v945, %v945
          %v978 = vpack.c.b16 %v946, %v946
          %v979 = vpack.c.b16 %v947, %v947
          %1012 = vst [vmem:[%s227] sm:$0xf] %v948
          %1013 = vst [vmem:[%s227 + $0x4] sm:$0xf] %v949
          %1014 = vst [vmem:[%s227 + $0x8] sm:$0xf] %v950
          %1015 = vst [vmem:[%s227 + $0xc] sm:$0xf] %v951
          %1016 = vst [vmem:[%s227 + $0x10] sm:$0xf] %v952
          %1017 = vst [vmem:[%s227 + $0x14] sm:$0xf] %v953
          %1018 = vst [vmem:[%s227 + $0x18] sm:$0xf] %v954
          %1019 = vst [vmem:[%s227 + $0x1c] sm:$0xf] %v955
          %1020 = vst [vmem:[%s227 + $0x20] sm:$0xf] %v956
          %1021 = vst [vmem:[%s227 + $0x24] sm:$0xf] %v957
          %1022 = vst [vmem:[%s227 + $0x28] sm:$0xf] %v958
          %1023 = vst [vmem:[%s227 + $0x2c] sm:$0xf] %v959
          %1024 = vst [vmem:[%s227 + $0x30] sm:$0xf] %v960
          %1025 = vst [vmem:[%s227 + $0x34] sm:$0xf] %v961
          %1026 = vst [vmem:[%s227 + $0x38] sm:$0xf] %v962
          %1027 = vst [vmem:[%s227 + $0x3c] sm:$0xf] %v963
          %1028 = vst [vmem:[%s227 + $0x40] sm:$0xf] %v964
          %1029 = vst [vmem:[%s227 + $0x44] sm:$0xf] %v965
          %1030 = vst [vmem:[%s227 + $0x48] sm:$0xf] %v966
          %1031 = vst [vmem:[%s227 + $0x4c] sm:$0xf] %v967
          %1032 = vst [vmem:[%s227 + $0x50] sm:$0xf] %v968
          %1033 = vst [vmem:[%s227 + $0x54] sm:$0xf] %v969
          %1034 = vst [vmem:[%s227 + $0x58] sm:$0xf] %v970
          %1035 = vst [vmem:[%s227 + $0x5c] sm:$0xf] %v971
          %1036 = vst [vmem:[%s227 + $0x60] sm:$0xf] %v972
          %1037 = vst [vmem:[%s227 + $0x64] sm:$0xf] %v973
          %1038 = vst [vmem:[%s227 + $0x68] sm:$0xf] %v974
          %1039 = vst [vmem:[%s227 + $0x6c] sm:$0xf] %v975
          %1040 = vst [vmem:[%s227 + $0x70] sm:$0xf] %v976
          %1041 = vst [vmem:[%s227 + $0x74] sm:$0xf] %v977
          %1042 = vst [vmem:[%s227 + $0x78] sm:$0xf] %v978
          %1043 = vst [vmem:[%s227 + $0x7c] sm:$0xf] %v979
        $region44: #{tpu_custom_call.1} parent=35 // pred_fallthru
          _
        %s1044 = sand.u32 %s134, 1
        %s1045 = scalar_lea.sflag [#allocation4], %s1044
        %s1046 = sand.u32 %s134, 1
        %s1047 = smul.addr %s1046, 128
        %s1048 = scalar_lea.vmem [#allocation3], %s1047
        // Predicated region
        $region45: #{tpu_custom_call.1} parent=35 // pred_check
          %p1049 = pneg %p144
        $region46: #{tpu_custom_call.1} parent=35 // pred_check_branch
          %1051 = sbr.rel (%p1049) target = $region48
        $region47: #{tpu_custom_call.1} parent=35 // pred_region
          %s1052 = smul.u32 32, %s22
          %s1054 = ssub.s32 2048, 2048
          %1055 = vsyncadd %s1045, %s1054
          %s1056 = smul.addr %s1052, 64
          %s1057 = scalar_lea.hbm %s4, %s1056
          %s1058 = sshll.u32 %s1048, 4
          %s1059 = int_to_ptr.vmem [resolvable:$true] %s1058
          %1064 = dma.vmem_to_hbm [thread:$0]  %s1059, 2048, %s1057, %s1045, 64, 64, 4
        $region48: #{tpu_custom_call.1} parent=35 // pred_fallthru
          _
      $region36: #{tpu_custom_call.1} parent=5 // pred_fallthru
        _
      %p1065 = scmp.le.s32.totalorder 2, %s13
      // Predicated region
      $region49: #{tpu_custom_call.1} parent=5 // pred_check
        %p1066 = pneg %p1065
      $region50: #{tpu_custom_call.1} parent=5 // pred_check_branch
        %1068 = sbr.rel (%p1066) target = $region52
      $region51: #{tpu_custom_call.1} parent=5 // pred_region
        %s1069 = ssub.s32 %s13, 2
        // Predicated region
        $region53: #{tpu_custom_call.1} parent=51 // pred_check
          %p1070 = pneg %p150
        $region54: #{tpu_custom_call.1} parent=51 // pred_check_branch
          %1072 = sbr.rel (%p1070) target = $region56
        $region55: #{tpu_custom_call.1} parent=51 // pred_region
          %s1073 = sand.u32 %s135, 1
          %s1074 = scalar_lea.sflag [#allocation4], %s1073
          %s1075 = sand.u32 %s135, 1
          %s1076 = smul.addr %s1075, 128
          %s1077 = scalar_lea.vmem [#allocation3], %s1076
          %1078 = dma.done %s1074, 2048
        $region56: #{tpu_custom_call.1} parent=51 // pred_fallthru
          _
      $region52: #{tpu_custom_call.1} parent=5 // pred_fallthru
        _
    $region6: #{tpu_custom_call.1} parent=1 // loop_footer
      %s17 = sadd.s32 1, %s13
    $region7: #{tpu_custom_call.1} parent=1 // loop_footer_branch
      %12 = sbr.rel target = $region3
    $region8: #{tpu_custom_call.1} parent=1 // loop_exit
      _
    %1079 = vsyncpa [#allocation4], 1
    %s1080 = scalar_lea.sflag [#allocation4], 1
    %1081 = vsyncpa %s1080, 1

</llo_original>
